<compile_context>
chip_gen: v5e
topology: v5e:2x2
jax: 0.10.0
libtpu: 0.0.40
codegen_flags: <defaults>
</compile_context>

<pallas_src>
import math
import functools

import jax
import jax.numpy as jnp
from jax.experimental import pallas as pl
from jax.experimental.pallas import tpu as pltpu


def _round_up(n, m):
    return ((n + m - 1) // m) * m


def _choose_heads_per_group(num_heads, head_dim, target_width=256):
    """Smallest divisor G of H with G*D >= target (MXU/lane dense).
    Falls back to G = H (fully collapsed head axis) for tiny problems."""
    for g in range(1, num_heads + 1):
        if num_heads % g == 0 and g * head_dim >= target_width:
            return g
    return num_heads


def _mha_group_kernel(xq_ref, k_ref, v_ref, wq_ref, bq_ref, wo_ref, bo_ref,
                      o_ref, *, head_dim, heads_per_group):
    """One (query block, head group) grid step.  Accumulates the group's
    output-projection contribution directly into o_ref (VMEM-resident across
    the head-group reduction axis)."""
    g = pl.program_id(1)
    D = head_dim

    @pl.when(g == 0)
    def _():
        o_ref[...] = jnp.zeros_like(o_ref)

    xq = xq_ref[...]                  # (TQ, E)   bf16 (cast once in wrapper)
    k_all = k_ref[...]                # (S, G*D)  bf16 (precomputed in wrapper)
    v_all = v_ref[...]                # (S, G*D)  bf16

    # Per-group Q projection; 1/sqrt(D) is pre-folded into Wq / bq.
    q_g = (jnp.dot(xq, wq_ref[...], preferred_element_type=jnp.float32)
           + bq_ref[...])             # (TQ, G*D) f32

    ctx_heads = []
    for j in range(heads_per_group):  # static unroll; G is a small constant
        lo, hi = j * D, (j + 1) * D
        q_h = q_g[:, lo:hi].astype(jnp.bfloat16)          # (TQ, D)
        k_h = k_all[:, lo:hi]                             # (S,  D)
        v_h = v_all[:, lo:hi]                             # (S,  D)

        # Scores: contract the head dim directly (no materialized transpose).
        s = jax.lax.dot_general(
            q_h, k_h, dimension_numbers=(((1,), (1,)), ((), ())),
            preferred_element_type=jnp.float32)           # (TQ, S)

        # Softmax in f32; normalize AFTER the PV matmul so the reciprocal
        # multiply is (TQ, D) work instead of (TQ, S).
        s = s - jnp.max(s, axis=-1, keepdims=True)
        p = jnp.exp(s)
        denom = jnp.sum(p, axis=-1, keepdims=True)        # (TQ, 1)
        ctx_un = jnp.dot(p.astype(jnp.bfloat16), v_h,
                         preferred_element_type=jnp.float32)   # (TQ, D)
        ctx_heads.append(ctx_un * pl.reciprocal(denom, approx=True))

    ctx_g = jnp.concatenate(ctx_heads, axis=-1).astype(jnp.bfloat16)  # (TQ, G*D)

    # One contraction-dense output projection per group, f32 accumulation
    # straight into the resident output block.
    o_ref[...] += jnp.dot(ctx_g, wo_ref[...],
                          preferred_element_type=jnp.float32)         # (TQ, E)

    @pl.when(g == pl.num_programs(1) - 1)
    def _():
        o_ref[...] += bo_ref[...]


def self_attention_pallas(x, params, *, num_heads, q_block=256):
    """x: (S, E) f32. Returns (S, 1, E) matching the PyTorch module's output."""
    S, E = x.shape
    H = num_heads
    assert E % H == 0, "embed_dim must be divisible by num_heads"
    D = E // H
    wq_t, wk_t, wv_t, bq, bk, bv, wo_t, bo = params

    G = _choose_heads_per_group(H, D)     # heads per grid step
    NG = H // G                           # head-group grid extent
    GD = G * D
    scale = 1.0 / math.sqrt(D)

    # ---- wrapper-side (XLA) prep: free reshapes + one-off K/V GEMMs ----
    # K / V projected once here (f32 GEMMs, then bf16 for streaming).
    k_heads = ((x @ wk_t + bk).reshape(S, NG, GD)
               .transpose(1, 0, 2).astype(jnp.bfloat16))          # (NG, S, GD)
    v_heads = ((x @ wv_t + bv).reshape(S, NG, GD)
               .transpose(1, 0, 2).astype(jnp.bfloat16))          # (NG, S, GD)

    wq_heads = ((wq_t * scale).reshape(E, NG, GD)
                .transpose(1, 0, 2).astype(jnp.bfloat16))         # (NG, E, GD)
    bq_heads = (bq * scale).reshape(1, NG, GD).transpose(1, 0, 2)  # (NG, 1, GD) f32
    wo_heads = wo_t.reshape(NG, GD, E).astype(jnp.bfloat16)        # (NG, GD, E)

    # Query-block tiling; bf16 query stream halves activation DMA bytes.
    S8 = _round_up(S, 8)
    TQ = min(q_block, S8)
    # v7x has 2 TensorCores: keep >= 2 blocks on the parallel (query) axis
    # whenever the sequence is long enough for the split to pay off.
    if S8 // TQ < 2 and S8 >= 256:
        TQ = _round_up((S8 + 1) // 2, 8)
    S_pad = _round_up(S8, TQ)
    x_q = x.astype(jnp.bfloat16)
    if S_pad != S:
        x_q = jnp.pad(x_q, ((0, S_pad - S), (0, 0)))

    kernel = functools.partial(_mha_group_kernel, head_dim=D,
                               heads_per_group=G)

    out = pl.pallas_call(
        kernel,
        out_shape=jax.ShapeDtypeStruct((S_pad, E), jnp.float32),
        grid_spec=pltpu.PrefetchScalarGridSpec(
            num_scalar_prefetch=0,
            grid=(S_pad // TQ, NG),
            in_specs=[
                pl.BlockSpec((TQ, E), lambda i, g: (i, 0)),            # queries (bf16)
                pl.BlockSpec((None, S, GD), lambda i, g: (g, 0, 0)),   # K group (bf16)
                pl.BlockSpec((None, S, GD), lambda i, g: (g, 0, 0)),   # V group (bf16)
                pl.BlockSpec((None, E, GD), lambda i, g: (g, 0, 0)),   # Wq group (scaled)
                pl.BlockSpec((None, 1, GD), lambda i, g: (g, 0, 0)),   # bq group (scaled)
                pl.BlockSpec((None, GD, E), lambda i, g: (g, 0, 0)),   # Wo rows for group
                pl.BlockSpec((1, E), lambda i, g: (0, 0)),             # bo
            ],
            out_specs=pl.BlockSpec((TQ, E), lambda i, g: (i, 0)),
        ),
        compiler_params=pltpu.CompilerParams(
            dimension_semantics=("parallel", "arbitrary")),
    )(x_q, k_heads, v_heads, wq_heads, bq_heads, wo_heads, bo)

    out = out[:S]
    # PyTorch module returns (S, 1, E) (squeeze(0) is a no-op for S > 1).
    return out[:, None, :]


def init_params(key, embed_dim):
    """Deterministic synthetic params mimicking nn.MultiheadAttention's shapes:
       in_proj_weight (3E, E) xavier-uniform, in_proj_bias zeros,
       out_proj.weight (E, E), out_proj.bias zeros."""
    k1, k2 = jax.random.split(key)
    E = embed_dim
    bound_in = math.sqrt(6.0 / (E + 3 * E))
    in_proj_w = jax.random.uniform(k1, (3 * E, E), jnp.float32, -bound_in, bound_in)
    out_bound = 1.0 / math.sqrt(E)
    out_proj_w = jax.random.uniform(k2, (E, E), jnp.float32, -out_bound, out_bound)

    wq = in_proj_w[0 * E:1 * E]      # (E, E), applied as x @ wq.T
    wk = in_proj_w[1 * E:2 * E]
    wv = in_proj_w[2 * E:3 * E]

    zeros_b = jnp.zeros((1, E), jnp.float32)
    return (
        jnp.asarray(wq.T), jnp.asarray(wk.T), jnp.asarray(wv.T),
        zeros_b, zeros_b, zeros_b,
        jnp.asarray(out_proj_w.T), jnp.zeros((1, E), jnp.float32),
    )


def reference_mha(x, params, num_heads):
    """Pure-JAX f32 reference for sanity checking."""
    wq_t, wk_t, wv_t, bq, bk, bv, wo_t, bo = params
    S, E = x.shape
    D = E // num_heads
    q = x @ wq_t + bq
    k = x @ wk_t + bk
    v = x @ wv_t + bv
    qh = q.reshape(S, num_heads, D).transpose(1, 0, 2)
    kh = k.reshape(S, num_heads, D).transpose(1, 0, 2)
    vh = v.reshape(S, num_heads, D).transpose(1, 0, 2)
    s = jnp.einsum("hqd,hkd->hqk", qh, kh) / math.sqrt(D)
    p = jax.nn.softmax(s, axis=-1)
    ctx = jnp.einsum("hqk,hkd->hqd", p, vh).transpose(1, 0, 2).reshape(S, E)
    return (ctx @ wo_t + bo)[:, None, :]


if __name__ == "__main__":
    SEQ, EMBED, HEADS = 8, 32, 4

    key = jax.random.PRNGKey(0)
    kx, kp = jax.random.split(key)
    x = jax.random.normal(kx, (SEQ, EMBED), jnp.float32)
    params = init_params(kp, EMBED)

    out = self_attention_pallas(x, params, num_heads=HEADS)
    out = jax.block_until_ready(out)

    ref = reference_mha(x, params, HEADS)
    assert out.shape == (SEQ, 1, EMBED), out.shape
    # bf16 MXU operands + approx reciprocal -> looser tolerance than pure f32.
    assert jnp.allclose(out, ref, atol=2e-2, rtol=2e-2), "mismatch vs reference"

    print("KERNEL_OK")
</pallas_src>

<mosaic_0001>
module attributes {stable_mosaic.version = 11 : i64} {
  func.func @_mha_group_kernel(%arg0: i32, %arg1: i32, %arg2: memref<8x32xbf16, #tpu.memory_space<vmem>>, %arg3: memref<1x8x32xbf16, #tpu.memory_space<vmem>>, %arg4: memref<1x8x32xbf16, #tpu.memory_space<vmem>>, %arg5: memref<1x32x32xbf16, #tpu.memory_space<vmem>>, %arg6: memref<1x1x32xf32, #tpu.memory_space<vmem>>, %arg7: memref<1x32x32xbf16, #tpu.memory_space<vmem>>, %arg8: memref<1x32xf32, #tpu.memory_space<vmem>>, %arg9: memref<8x32xf32, #tpu.memory_space<vmem>>) attributes {dimension_semantics = [#tpu.dimension_semantics<parallel>, #tpu.dimension_semantics<arbitrary>], iteration_bounds = array<i64: 1, 1>, scalar_prefetch = 0 : i64, scratch_operands = 0 : i64, tpu.core_type = #tpu.core_type<tc>, window_params = [{transform_indices = @transform_0, window_bounds = array<i64: 8, 32>}, {transform_indices = @transform_1, window_bounds = array<i64: 1, 8, 32>}, {transform_indices = @transform_2, window_bounds = array<i64: 1, 8, 32>}, {transform_indices = @transform_3, window_bounds = array<i64: 1, 32, 32>}, {transform_indices = @transform_4, window_bounds = array<i64: 1, 1, 32>}, {transform_indices = @transform_5, window_bounds = array<i64: 1, 32, 32>}, {pipeline_mode = #tpu.pipeline_mode<synchronous>, transform_indices = @transform_6, window_bounds = array<i64: 1, 32>}, {transform_indices = @transform_7, window_bounds = array<i64: 8, 32>}]} {
    %c0_i32 = arith.constant 0 : i32
    %0 = arith.cmpi eq, %arg1, %c0_i32 : i32
    %1 = arith.extui %0 : i1 to i32
    %c0_i32_0 = arith.constant 0 : i32
    %2 = arith.cmpi ne, %1, %c0_i32_0 : i32
    scf.if %2 {
      %cst_40 = arith.constant 0.000000e+00 : f32
      %94 = vector.broadcast %cst_40 : f32 to vector<8x32xf32>
      %c0_41 = arith.constant 0 : index
      %c0_42 = arith.constant 0 : index
      %95 = vector.load %arg9[%c0_41, %c0_42] : memref<8x32xf32, #tpu.memory_space<vmem>>, vector<8x32xf32>
      tpu.vector_store %arg9[%c0_41, %c0_42], %94 {strides = array<i32>} : memref<8x32xf32, #tpu.memory_space<vmem>>, vector<8x32xf32>,
    } else {
    }
    %c0 = arith.constant 0 : index
    %c0_1 = arith.constant 0 : index
    %3 = vector.load %arg2[%c0, %c0_1] : memref<8x32xbf16, #tpu.memory_space<vmem>>, vector<8x32xbf16>
    %c0_2 = arith.constant 0 : index
    %c0_3 = arith.constant 0 : index
    %c0_4 = arith.constant 0 : index
    %4 = vector.load %arg3[%c0_2, %c0_3, %c0_4] : memref<1x8x32xbf16, #tpu.memory_space<vmem>>, vector<1x8x32xbf16>
    %5 = vector.shape_cast %4 : vector<1x8x32xbf16> to vector<8x32xbf16>
    %c0_5 = arith.constant 0 : index
    %c0_6 = arith.constant 0 : index
    %c0_7 = arith.constant 0 : index
    %6 = vector.load %arg4[%c0_5, %c0_6, %c0_7] : memref<1x8x32xbf16, #tpu.memory_space<vmem>>, vector<1x8x32xbf16>
    %7 = vector.shape_cast %6 : vector<1x8x32xbf16> to vector<8x32xbf16>
    %c0_8 = arith.constant 0 : index
    %c0_9 = arith.constant 0 : index
    %c0_10 = arith.constant 0 : index
    %8 = vector.load %arg5[%c0_8, %c0_9, %c0_10] : memref<1x32x32xbf16, #tpu.memory_space<vmem>>, vector<1x32x32xbf16>
    %9 = vector.shape_cast %8 : vector<1x32x32xbf16> to vector<32x32xbf16>
    %cst = arith.constant dense<0.000000e+00> : vector<8x32xf32>
    %10 = tpu.matmul %3, %9, %cst {dimension_numbers = #tpu.dot_dimension_numbers<[1], [0], [0], [1], [0, 0, 1, 1], [], []>} : vector<8x32xbf16>, vector<32x32xbf16>, vector<8x32xf32> -> vector<8x32xf32>
    %c0_11 = arith.constant 0 : index
    %c0_12 = arith.constant 0 : index
    %c0_13 = arith.constant 0 : index
    %11 = vector.load %arg6[%c0_11, %c0_12, %c0_13] : memref<1x1x32xf32, #tpu.memory_space<vmem>>, vector<1x1x32xf32>
    %12 = vector.shape_cast %11 : vector<1x1x32xf32> to vector<1x32xf32>
    %13 = vector.broadcast %12 : vector<1x32xf32> to vector<8x32xf32>
    %14 = arith.addf %10, %13 : vector<8x32xf32>
    %15 = vector.extract_strided_slice %14 {offsets = [0, 0], sizes = [8, 8], strides = [1, 1]} : vector<8x32xf32> to vector<8x8xf32>
    %16 = arith.truncf %15 : vector<8x8xf32> to vector<8x8xbf16>
    %17 = vector.extract_strided_slice %5 {offsets = [0, 0], sizes = [8, 8], strides = [1, 1]} : vector<8x32xbf16> to vector<8x8xbf16>
    %18 = vector.extract_strided_slice %7 {offsets = [0, 0], sizes = [8, 8], strides = [1, 1]} : vector<8x32xbf16> to vector<8x8xbf16>
    %cst_14 = arith.constant dense<0.000000e+00> : vector<8x8xf32>
    %19 = tpu.matmul %16, %17, %cst_14 {dimension_numbers = #tpu.dot_dimension_numbers<[1], [1], [0], [0], [0, 0, 1, 0], [], []>} : vector<8x8xbf16>, vector<8x8xbf16>, vector<8x8xf32> -> vector<8x8xf32>
    %cst_15 = arith.constant dense<0xFF800000> : vector<8xf32>
    %20 = vector.multi_reduction <maximumf>, %19, %cst_15 [1] : vector<8x8xf32> to vector<8xf32>
    %21 = vector.shape_cast %20 : vector<8xf32> to vector<8x1xf32>
    %22 = vector.broadcast %21 : vector<8x1xf32> to vector<8x8xf32>
    %23 = arith.subf %19, %22 : vector<8x8xf32>
    %24 = math.exp %23 : vector<8x8xf32>
    %cst_16 = arith.constant dense<0.000000e+00> : vector<8xf32>
    %25 = vector.multi_reduction <add>, %24, %cst_16 [1] : vector<8x8xf32> to vector<8xf32>
    %26 = vector.shape_cast %25 : vector<8xf32> to vector<8x1xf32>
    %27 = arith.truncf %24 : vector<8x8xf32> to vector<8x8xbf16>
    %cst_17 = arith.constant dense<0.000000e+00> : vector<8x8xf32>
    %28 = tpu.matmul %27, %18, %cst_17 {dimension_numbers = #tpu.dot_dimension_numbers<[1], [0], [0], [1], [0, 0, 1, 1], [], []>} : vector<8x8xbf16>, vector<8x8xbf16>, vector<8x8xf32> -> vector<8x8xf32>
    %29 = tpu.reciprocal %26 {approx = true} : vector<8x1xf32> -> vector<8x1xf32>
    %30 = vector.broadcast %29 : vector<8x1xf32> to vector<8x8xf32>
    %31 = arith.mulf %28, %30 : vector<8x8xf32>
    %32 = vector.extract_strided_slice %14 {offsets = [0, 8], sizes = [8, 8], strides = [1, 1]} : vector<8x32xf32> to vector<8x8xf32>
    %33 = arith.truncf %32 : vector<8x8xf32> to vector<8x8xbf16>
    %34 = vector.extract_strided_slice %5 {offsets = [0, 8], sizes = [8, 8], strides = [1, 1]} : vector<8x32xbf16> to vector<8x8xbf16>
    %35 = vector.extract_strided_slice %7 {offsets = [0, 8], sizes = [8, 8], strides = [1, 1]} : vector<8x32xbf16> to vector<8x8xbf16>
    %cst_18 = arith.constant dense<0.000000e+00> : vector<8x8xf32>
    %36 = tpu.matmul %33, %34, %cst_18 {dimension_numbers = #tpu.dot_dimension_numbers<[1], [1], [0], [0], [0, 0, 1, 0], [], []>} : vector<8x8xbf16>, vector<8x8xbf16>, vector<8x8xf32> -> vector<8x8xf32>
    %cst_19 = arith.constant dense<0xFF800000> : vector<8xf32>
    %37 = vector.multi_reduction <maximumf>, %36, %cst_19 [1] : vector<8x8xf32> to vector<8xf32>
    %38 = vector.shape_cast %37 : vector<8xf32> to vector<8x1xf32>
    %39 = vector.broadcast %38 : vector<8x1xf32> to vector<8x8xf32>
    %40 = arith.subf %36, %39 : vector<8x8xf32>
    %41 = math.exp %40 : vector<8x8xf32>
    %cst_20 = arith.constant dense<0.000000e+00> : vector<8xf32>
    %42 = vector.multi_reduction <add>, %41, %cst_20 [1] : vector<8x8xf32> to vector<8xf32>
    %43 = vector.shape_cast %42 : vector<8xf32> to vector<8x1xf32>
    %44 = arith.truncf %41 : vector<8x8xf32> to vector<8x8xbf16>
    %cst_21 = arith.constant dense<0.000000e+00> : vector<8x8xf32>
    %45 = tpu.matmul %44, %35, %cst_21 {dimension_numbers = #tpu.dot_dimension_numbers<[1], [0], [0], [1], [0, 0, 1, 1], [], []>} : vector<8x8xbf16>, vector<8x8xbf16>, vector<8x8xf32> -> vector<8x8xf32>
    %46 = tpu.reciprocal %43 {approx = true} : vector<8x1xf32> -> vector<8x1xf32>
    %47 = vector.broadcast %46 : vector<8x1xf32> to vector<8x8xf32>
    %48 = arith.mulf %45, %47 : vector<8x8xf32>
    %49 = vector.extract_strided_slice %14 {offsets = [0, 16], sizes = [8, 8], strides = [1, 1]} : vector<8x32xf32> to vector<8x8xf32>
    %50 = arith.truncf %49 : vector<8x8xf32> to vector<8x8xbf16>
    %51 = vector.extract_strided_slice %5 {offsets = [0, 16], sizes = [8, 8], strides = [1, 1]} : vector<8x32xbf16> to vector<8x8xbf16>
    %52 = vector.extract_strided_slice %7 {offsets = [0, 16], sizes = [8, 8], strides = [1, 1]} : vector<8x32xbf16> to vector<8x8xbf16>
    %cst_22 = arith.constant dense<0.000000e+00> : vector<8x8xf32>
    %53 = tpu.matmul %50, %51, %cst_22 {dimension_numbers = #tpu.dot_dimension_numbers<[1], [1], [0], [0], [0, 0, 1, 0], [], []>} : vector<8x8xbf16>, vector<8x8xbf16>, vector<8x8xf32> -> vector<8x8xf32>
    %cst_23 = arith.constant dense<0xFF800000> : vector<8xf32>
    %54 = vector.multi_reduction <maximumf>, %53, %cst_23 [1] : vector<8x8xf32> to vector<8xf32>
    %55 = vector.shape_cast %54 : vector<8xf32> to vector<8x1xf32>
    %56 = vector.broadcast %55 : vector<8x1xf32> to vector<8x8xf32>
    %57 = arith.subf %53, %56 : vector<8x8xf32>
    %58 = math.exp %57 : vector<8x8xf32>
    %cst_24 = arith.constant dense<0.000000e+00> : vector<8xf32>
    %59 = vector.multi_reduction <add>, %58, %cst_24 [1] : vector<8x8xf32> to vector<8xf32>
    %60 = vector.shape_cast %59 : vector<8xf32> to vector<8x1xf32>
    %61 = arith.truncf %58 : vector<8x8xf32> to vector<8x8xbf16>
    %cst_25 = arith.constant dense<0.000000e+00> : vector<8x8xf32>
    %62 = tpu.matmul %61, %52, %cst_25 {dimension_numbers = #tpu.dot_dimension_numbers<[1], [0], [0], [1], [0, 0, 1, 1], [], []>} : vector<8x8xbf16>, vector<8x8xbf16>, vector<8x8xf32> -> vector<8x8xf32>
    %63 = tpu.reciprocal %60 {approx = true} : vector<8x1xf32> -> vector<8x1xf32>
    %64 = vector.broadcast %63 : vector<8x1xf32> to vector<8x8xf32>
    %65 = arith.mulf %62, %64 : vector<8x8xf32>
    %66 = vector.extract_strided_slice %14 {offsets = [0, 24], sizes = [8, 8], strides = [1, 1]} : vector<8x32xf32> to vector<8x8xf32>
    %67 = arith.truncf %66 : vector<8x8xf32> to vector<8x8xbf16>
    %68 = vector.extract_strided_slice %5 {offsets = [0, 24], sizes = [8, 8], strides = [1, 1]} : vector<8x32xbf16> to vector<8x8xbf16>
    %69 = vector.extract_strided_slice %7 {offsets = [0, 24], sizes = [8, 8], strides = [1, 1]} : vector<8x32xbf16> to vector<8x8xbf16>
    %cst_26 = arith.constant dense<0.000000e+00> : vector<8x8xf32>
    %70 = tpu.matmul %67, %68, %cst_26 {dimension_numbers = #tpu.dot_dimension_numbers<[1], [1], [0], [0], [0, 0, 1, 0], [], []>} : vector<8x8xbf16>, vector<8x8xbf16>, vector<8x8xf32> -> vector<8x8xf32>
    %cst_27 = arith.constant dense<0xFF800000> : vector<8xf32>
    %71 = vector.multi_reduction <maximumf>, %70, %cst_27 [1] : vector<8x8xf32> to vector<8xf32>
    %72 = vector.shape_cast %71 : vector<8xf32> to vector<8x1xf32>
    %73 = vector.broadcast %72 : vector<8x1xf32> to vector<8x8xf32>
    %74 = arith.subf %70, %73 : vector<8x8xf32>
    %75 = math.exp %74 : vector<8x8xf32>
    %cst_28 = arith.constant dense<0.000000e+00> : vector<8xf32>
    %76 = vector.multi_reduction <add>, %75, %cst_28 [1] : vector<8x8xf32> to vector<8xf32>
    %77 = vector.shape_cast %76 : vector<8xf32> to vector<8x1xf32>
    %78 = arith.truncf %75 : vector<8x8xf32> to vector<8x8xbf16>
    %cst_29 = arith.constant dense<0.000000e+00> : vector<8x8xf32>
    %79 = tpu.matmul %78, %69, %cst_29 {dimension_numbers = #tpu.dot_dimension_numbers<[1], [0], [0], [1], [0, 0, 1, 1], [], []>} : vector<8x8xbf16>, vector<8x8xbf16>, vector<8x8xf32> -> vector<8x8xf32>
    %80 = tpu.reciprocal %77 {approx = true} : vector<8x1xf32> -> vector<8x1xf32>
    %81 = vector.broadcast %80 : vector<8x1xf32> to vector<8x8xf32>
    %82 = arith.mulf %79, %81 : vector<8x8xf32>
    %83 = tpu.concatenate %31, %48, %65, %82 in 1 : vector<8x8xf32>, vector<8x8xf32>, vector<8x8xf32>, vector<8x8xf32> -> vector<8x32xf32>
    %84 = arith.truncf %83 : vector<8x32xf32> to vector<8x32xbf16>
    %c0_30 = arith.constant 0 : index
    %c0_31 = arith.constant 0 : index
    %85 = vector.load %arg9[%c0_30, %c0_31] : memref<8x32xf32, #tpu.memory_space<vmem>>, vector<8x32xf32>
    %c0_32 = arith.constant 0 : index
    %c0_33 = arith.constant 0 : index
    %c0_34 = arith.constant 0 : index
    %86 = vector.load %arg7[%c0_32, %c0_33, %c0_34] : memref<1x32x32xbf16, #tpu.memory_space<vmem>>, vector<1x32x32xbf16>
    %87 = vector.shape_cast %86 : vector<1x32x32xbf16> to vector<32x32xbf16>
    %cst_35 = arith.constant dense<0.000000e+00> : vector<8x32xf32>
    %88 = tpu.matmul %84, %87, %cst_35 {dimension_numbers = #tpu.dot_dimension_numbers<[1], [0], [0], [1], [0, 0, 1, 1], [], []>} : vector<8x32xbf16>, vector<32x32xbf16>, vector<8x32xf32> -> vector<8x32xf32>
    %89 = arith.addf %85, %88 : vector<8x32xf32>
    %c0_36 = arith.constant 0 : index
    %c0_37 = arith.constant 0 : index
    %90 = vector.load %arg9[%c0_36, %c0_37] : memref<8x32xf32, #tpu.memory_space<vmem>>, vector<8x32xf32>
    tpu.vector_store %arg9[%c0_36, %c0_37], %89 {strides = array<i32>} : memref<8x32xf32, #tpu.memory_space<vmem>>, vector<8x32xf32>,
    %c0_i32_38 = arith.constant 0 : i32
    %91 = arith.cmpi eq, %arg1, %c0_i32_38 : i32
    %92 = arith.extui %91 : i1 to i32
    %c0_i32_39 = arith.constant 0 : i32
    %93 = arith.cmpi ne, %92, %c0_i32_39 : i32
    scf.if %93 {
      %c0_40 = arith.constant 0 : index
      %c0_41 = arith.constant 0 : index
      %94 = vector.load %arg9[%c0_40, %c0_41] : memref<8x32xf32, #tpu.memory_space<vmem>>, vector<8x32xf32>
      %c0_42 = arith.constant 0 : index
      %c0_43 = arith.constant 0 : index
      %95 = vector.load %arg8[%c0_42, %c0_43] : memref<1x32xf32, #tpu.memory_space<vmem>>, vector<1x32xf32>
      %96 = vector.broadcast %95 : vector<1x32xf32> to vector<8x32xf32>
      %97 = arith.addf %94, %96 : vector<8x32xf32>
      %c0_44 = arith.constant 0 : index
      %c0_45 = arith.constant 0 : index
      %98 = vector.load %arg9[%c0_44, %c0_45] : memref<8x32xf32, #tpu.memory_space<vmem>>, vector<8x32xf32>
      tpu.vector_store %arg9[%c0_44, %c0_45], %97 {strides = array<i32>} : memref<8x32xf32, #tpu.memory_space<vmem>>, vector<8x32xf32>,
    } else {
    }
    return
  }
  func.func @transform_0(%arg0: i32, %arg1: i32) -> (i32, i32) {
    %c0_i32 = arith.constant 0 : i32
    %c0_i32_0 = arith.constant 0 : i32
    return %arg0, %c0_i32 : i32, i32
  }
  func.func @transform_1(%arg0: i32, %arg1: i32) -> (i32, i32, i32) {
    %c0_i32 = arith.constant 0 : i32
    %c0_i32_0 = arith.constant 0 : i32
    %c0_i32_1 = arith.constant 0 : i32
    return %arg1, %c0_i32, %c0_i32_0 : i32, i32, i32
  }
  func.func @transform_2(%arg0: i32, %arg1: i32) -> (i32, i32, i32) {
    %c0_i32 = arith.constant 0 : i32
    %c0_i32_0 = arith.constant 0 : i32
    %c0_i32_1 = arith.constant 0 : i32
    return %arg1, %c0_i32, %c0_i32_0 : i32, i32, i32
  }
  func.func @transform_3(%arg0: i32, %arg1: i32) -> (i32, i32, i32) {
    %c0_i32 = arith.constant 0 : i32
    %c0_i32_0 = arith.constant 0 : i32
    %c0_i32_1 = arith.constant 0 : i32
    return %arg1, %c0_i32, %c0_i32_0 : i32, i32, i32
  }
  func.func @transform_4(%arg0: i32, %arg1: i32) -> (i32, i32, i32) {
    %c0_i32 = arith.constant 0 : i32
    %c0_i32_0 = arith.constant 0 : i32
    %c0_i32_1 = arith.constant 0 : i32
    return %arg1, %c0_i32, %c0_i32_0 : i32, i32, i32
  }
  func.func @transform_5(%arg0: i32, %arg1: i32) -> (i32, i32, i32) {
    %c0_i32 = arith.constant 0 : i32
    %c0_i32_0 = arith.constant 0 : i32
    %c0_i32_1 = arith.constant 0 : i32
    return %arg1, %c0_i32, %c0_i32_0 : i32, i32, i32
  }
  func.func @transform_6(%arg0: i32, %arg1: i32) -> (i32, i32) {
    %c0_i32 = arith.constant 0 : i32
    %c0_i32_0 = arith.constant 0 : i32
    %c0_i32_1 = arith.constant 0 : i32
    return %c0_i32, %c0_i32_0 : i32, i32
  }
  func.func @transform_7(%arg0: i32, %arg1: i32) -> (i32, i32) {
    %c0_i32 = arith.constant 0 : i32
    %c0_i32_0 = arith.constant 0 : i32
    return %arg0, %c0_i32 : i32, i32
  }
}

</mosaic_0001>

<llo_original>
// kernel: tpu_custom_call.1
$region0: #{tpu_custom_call.1}
  #allocation0 [shape = 'u32[]', space=smem, size = 0x4, offset = 0x4, fixed_abs, tag = 'smem constant byte address 0x4 - core index']
  #allocation1 [shape = 'u32[72,128]{1,0:T(1,128)}', space=vmem, size = 0x9000, scoped, tag = 'internal scratch']
  %s0 = inlined_call_operand.hbm [shape: bf16[8,32], index: 0, kind: input, shape index: {}]
  %s1 = inlined_call_operand.hbm [shape: bf16[1,8,32], index: 1, kind: input, shape index: {}]
  %s2 = inlined_call_operand.hbm [shape: bf16[1,8,32], index: 2, kind: input, shape index: {}]
  %s3 = inlined_call_operand.hbm [shape: bf16[1,32,32], index: 3, kind: input, shape index: {}]
  %s4 = inlined_call_operand.vmem [shape: f32[1,1,32], index: 4, kind: input, shape index: {}]
  %s5 = inlined_call_operand.hbm [shape: bf16[1,32,32], index: 5, kind: input, shape index: {}]
  %s6 = inlined_call_operand.vmem [shape: f32[1,32], index: 6, kind: input, shape index: {}]
  %s7 = inlined_call_operand.hbm [shape: f32[8,32], index: 7, kind: output, shape index: {}]
  %s8 = sld [smem:[#allocation0]]
  $region66: #{tpu_custom_call.1} parent=0
    _
  %s10 = ssub.s32 1, %s8
  %s11 = scalar_select 0, %s10, %s8
  $region1: #{tpu_custom_call.1} parent=0
    #allocation2 [shape = 'u8[2048]{0}', space=vmem, size = 0x800, scoped, tag = 'input window, operand 0, single buffered']
    #allocation3 [shape = 's32[1]{0}', space=sflag, size = 0x4, scoped, tag = 'scoped memory for tpu_custom_call.1']
    #allocation4 [shape = 's32[1]{0}', space=sflag, size = 0x4, scoped, tag = 'scoped memory for tpu_custom_call.1']
    #allocation5 [shape = 'u8[2048]{0}', space=vmem, size = 0x800, scoped, tag = 'input window, operand 1, single buffered']
    #allocation6 [shape = 's32[1]{0}', space=sflag, size = 0x4, scoped, tag = 'scoped memory for tpu_custom_call.1']
    #allocation7 [shape = 'u8[2048]{0}', space=vmem, size = 0x800, scoped, tag = 'input window, operand 2, single buffered']
    #allocation8 [shape = 'u8[8192]{0}', space=vmem, size = 0x2000, scoped, tag = 'input window, operand 3, single buffered']
    #allocation9 [shape = 's32[1]{0}', space=sflag, size = 0x4, scoped, tag = 'scoped memory for tpu_custom_call.1']
    #allocation10 [shape = 'u8[8192]{0}', space=vmem, size = 0x2000, scoped, tag = 'input window, operand 5, single buffered']
    #allocation11 [shape = 'u8[4096]{0}', space=vmem, size = 0x1000, scoped, tag = 'output window, operand 0, single buffered']
    %12 = vsyncpa [#allocation3], 0
    %13 = vsyncpa [#allocation6], 0
    %14 = vsyncpa [#allocation9], 0
    %15 = vsyncpa [#allocation4], 0
    // Predicated region
    $region2: #{tpu_custom_call.1} parent=1 // pred_check
      _
    $region3: #{tpu_custom_call.1} parent=1 // pred_check_branch
      %17 = sbr.rel (0) target = $region5
    $region4: #{tpu_custom_call.1} parent=1 // pred_region
      %19 = vsyncadd [#allocation3], 0
      %s21 = sshll.u32 %s0, 4
      %s22 = int_to_ptr.hbm [resolvable:$true] %s21
      %s23 = sshll.u32 [#allocation2], 4
      %s24 = int_to_ptr.vmem [resolvable:$true] %s23
      %26 = dma.hbm_to_vmem [thread:$0]  %s22, 64, %s24, [#allocation3]
    $region5: #{tpu_custom_call.1} parent=1 // pred_fallthru
      _
    // Predicated region
    $region6: #{tpu_custom_call.1} parent=1 // pred_check
      _
    $region7: #{tpu_custom_call.1} parent=1 // pred_check_branch
      %28 = sbr.rel (0) target = $region9
    $region8: #{tpu_custom_call.1} parent=1 // pred_region
      %30 = vsyncadd [#allocation6], 0
      %s32 = sshll.u32 %s1, 4
      %s33 = int_to_ptr.hbm [resolvable:$true] %s32
      %s34 = sshll.u32 [#allocation5], 4
      %s35 = int_to_ptr.vmem [resolvable:$true] %s34
      %37 = dma.hbm_to_vmem [thread:$0]  %s33, 64, %s35, [#allocation6]
    $region9: #{tpu_custom_call.1} parent=1 // pred_fallthru
      _
    // Predicated region
    $region10: #{tpu_custom_call.1} parent=1 // pred_check
      _
    $region11: #{tpu_custom_call.1} parent=1 // pred_check_branch
      %39 = sbr.rel (0) target = $region13
    $region12: #{tpu_custom_call.1} parent=1 // pred_region
      %41 = vsyncadd [#allocation6], 0
      %s43 = sshll.u32 %s2, 4
      %s44 = int_to_ptr.hbm [resolvable:$true] %s43
      %s45 = sshll.u32 [#allocation7], 4
      %s46 = int_to_ptr.vmem [resolvable:$true] %s45
      %48 = dma.hbm_to_vmem [thread:$0]  %s44, 64, %s46, [#allocation6]
    $region13: #{tpu_custom_call.1} parent=1 // pred_fallthru
      _
    // Predicated region
    $region14: #{tpu_custom_call.1} parent=1 // pred_check
      _
    $region15: #{tpu_custom_call.1} parent=1 // pred_check_branch
      %50 = sbr.rel (0) target = $region17
    $region16: #{tpu_custom_call.1} parent=1 // pred_region
      %52 = vsyncadd [#allocation9], 0
      %s53 = sshll.u32 %s3, 4
      %s54 = int_to_ptr.hbm [resolvable:$true] %s53
      %s55 = sshll.u32 [#allocation8], 4
      %s56 = int_to_ptr.vmem [resolvable:$true] %s55
      %61 = dma.hbm_to_vmem [thread:$0]  %s54, 256, %s56, [#allocation9], 64, 64, 4
    $region17: #{tpu_custom_call.1} parent=1 // pred_fallthru
      _
    // Predicated region
    $region18: #{tpu_custom_call.1} parent=1 // pred_check
      _
    $region19: #{tpu_custom_call.1} parent=1 // pred_check_branch
      %63 = sbr.rel (0) target = $region21
    $region20: #{tpu_custom_call.1} parent=1 // pred_region
      _
    $region21: #{tpu_custom_call.1} parent=1 // pred_fallthru
      _
    // Predicated region
    $region22: #{tpu_custom_call.1} parent=1 // pred_check
      _
    $region23: #{tpu_custom_call.1} parent=1 // pred_check_branch
      %65 = sbr.rel (0) target = $region25
    $region24: #{tpu_custom_call.1} parent=1 // pred_region
      %67 = vsyncadd [#allocation9], 0
      %s68 = sshll.u32 %s5, 4
      %s69 = int_to_ptr.hbm [resolvable:$true] %s68
      %s70 = sshll.u32 [#allocation10], 4
      %s71 = int_to_ptr.vmem [resolvable:$true] %s70
      %76 = dma.hbm_to_vmem [thread:$0]  %s69, 256, %s71, [#allocation9], 64, 64, 4
    $region25: #{tpu_custom_call.1} parent=1 // pred_fallthru
      _
    // Predicated region
    $region26: #{tpu_custom_call.1} parent=1 // pred_check
      _
    $region27: #{tpu_custom_call.1} parent=1 // pred_check_branch
      %78 = sbr.rel (0) target = $region29
    $region28: #{tpu_custom_call.1} parent=1 // pred_region
      _
    $region29: #{tpu_custom_call.1} parent=1 // pred_fallthru
      _
    // Predicated region
    $region30: #{tpu_custom_call.1} parent=1 // pred_check
      _
    $region31: #{tpu_custom_call.1} parent=1 // pred_check_branch
      %80 = sbr.rel (0) target = $region33
    $region32: #{tpu_custom_call.1} parent=1 // pred_region
      %82 = dma.done [#allocation3], 64
    $region33: #{tpu_custom_call.1} parent=1 // pred_fallthru
      _
    // Predicated region
    $region34: #{tpu_custom_call.1} parent=1 // pred_check
      _
    $region35: #{tpu_custom_call.1} parent=1 // pred_check_branch
      %84 = sbr.rel (0) target = $region37
    $region36: #{tpu_custom_call.1} parent=1 // pred_region
      %86 = dma.done [#allocation6], 64
    $region37: #{tpu_custom_call.1} parent=1 // pred_fallthru
      _
    // Predicated region
    $region38: #{tpu_custom_call.1} parent=1 // pred_check
      _
    $region39: #{tpu_custom_call.1} parent=1 // pred_check_branch
      %88 = sbr.rel (0) target = $region41
    $region40: #{tpu_custom_call.1} parent=1 // pred_region
      %90 = dma.done [#allocation6], 64
    $region41: #{tpu_custom_call.1} parent=1 // pred_fallthru
      _
    // Predicated region
    $region42: #{tpu_custom_call.1} parent=1 // pred_check
      _
    $region43: #{tpu_custom_call.1} parent=1 // pred_check_branch
      %92 = sbr.rel (0) target = $region45
    $region44: #{tpu_custom_call.1} parent=1 // pred_region
      %94 = dma.done [#allocation9], 256
    $region45: #{tpu_custom_call.1} parent=1 // pred_fallthru
      _
    // Predicated region
    $region46: #{tpu_custom_call.1} parent=1 // pred_check
      _
    $region47: #{tpu_custom_call.1} parent=1 // pred_check_branch
      %96 = sbr.rel (0) target = $region49
    $region48: #{tpu_custom_call.1} parent=1 // pred_region
      %98 = dma.done [#allocation9], 256
    $region49: #{tpu_custom_call.1} parent=1 // pred_fallthru
      _
    %p100 = scmp.eq.s32.totalorder 0, 0
    // Predicated region
    $region50: #{tpu_custom_call.1} parent=1 // pred_check
      %p101 = pneg %p100
    $region51: #{tpu_custom_call.1} parent=1 // pred_check_branch
      %103 = sbr.rel (%p101) target = $region53
    $region52: #{tpu_custom_call.1} parent=1 // pred_region
      %vm104 = vcmask 261120
      %105 = vst.msk [vmem:[#allocation11] sm:$0xff] %vm104, 0.0
    $region53: #{tpu_custom_call.1} parent=1 // pred_fallthru
      _
    %v106 = vld [vmem:[#allocation2] sm:$0xf]
    %v107 = vld [vmem:[#allocation5] sm:$0xf]
    %v108 = vld [vmem:[#allocation7] sm:$0xf]
    %v109 = vld [vmem:[#allocation8] sm:$0xf]
    %v110 = vld [vmem:[#allocation8 + $0x4] sm:$0xf]
    %v111 = vld [vmem:[#allocation8 + $0x8] sm:$0xf]
    %v112 = vld [vmem:[#allocation8 + $0xc] sm:$0xf]
    %v113 = vld [vmem:[%s4] sm:$0x1]
    %v115 = vperm.slane %v113, 0
    %v121 = vunpack.c.l.b16 %v109
    %v122 = vunpack.c.l.b16 %v110
    %v123 = vunpack.c.l.b16 %v111
    %v124 = vunpack.c.l.b16 %v112
    %v125 = vpack.c.b16 %v122, %v121
    %v126 = vpack.c.b16 %v124, %v123
    %vm129 = vcmask 261120
    %v131 = vsel %vm129, %v106, 0
    %133 = vmatpush.bf16.msra.mxu0 0
    %134 = vmatpush.bf16.msra.mxu0 0
    %135 = vmatpush.bf16.msra.mxu0 0
    %136 = vmatpush.bf16.msra.mxu0 0
    %137 = vmatpush.bf16.msra.mxu0 0
    %138 = vmatpush.bf16.msra.mxu0 0
    %139 = vmatpush.bf16.msra.mxu0 %v126
    %140 = vmatpush.bf16.msra.mxu0 %v125
    %141 = vmatmul.bf16.gmra.mxu0 %v131
    %v142 = vpop.f32.mrf.mxu0
    %v143 = vadd.f32 %v115, %v142
    %v144 = vpop.f32.mrf.mxu0
    %145 = vdwg.mxu0
    %v146 = vpack.c.bf16 %v143, %v143
    %vm147 = vcmask 64512
    %v149 = vsel %vm147, %v146, 0
    %v152 = vsel %vm147, %v107, 0
    %154 = vmatpush.bf16.xpose.msra.mxu0 0
    %155 = vmatpush.bf16.xpose.msra.mxu0 0
    %156 = vmatpush.bf16.xpose.msra.mxu0 0
    %157 = vmatpush.bf16.xpose.msra.mxu0 0
    %158 = vmatpush.bf16.xpose.msra.mxu0 0
    %159 = vmatpush.bf16.xpose.msra.mxu0 0
    %160 = vmatpush.bf16.xpose.msra.mxu0 0
    %161 = vmatpush.bf16.xpose.msra.mxu0 %v152
    %162 = vmatmul.bf16.gmra.mxu0 %v149
    %v163 = vpop.f32.mrf.mxu0
    %v164 = vadd.f32 0.0, %v163
    %v165 = vpop.f32.mrf.mxu0
    %166 = vdwg.mxu0
    %v167 = vsel %vm147, %v164, -inf
    %168 = vmax.xlane.f32.xlu0 %v167
    %v169 = vpop.xlane.xlu0 %168
    %v170 = vsub.f32 %v164, %v169
    %v171 = vmul.f32 %v170, 1.442695
    %v172 = vpow.pop %v171
    %v173 = vsel %vm147, %v172, 0.0
    %174 = vadd.xlane.f32.xlu0 %v173
    %v175 = vpop.xlane.xlu0 %174
    %v176 = vpack.c.bf16 %v172, %v172
    %v178 = vsel %vm147, %v176, 0
    %vm180 = vcmask 1043456
    %v182 = vsel %vm180, %v108, 0
    %184 = vmatpush.bf16.msra.mxu0 0
    %185 = vmatpush.bf16.msra.mxu0 0
    %186 = vmatpush.bf16.msra.mxu0 0
    %187 = vmatpush.bf16.msra.mxu0 0
    %188 = vmatpush.bf16.msra.mxu0 0
    %189 = vmatpush.bf16.msra.mxu0 0
    %190 = vmatpush.bf16.msra.mxu0 0
    %191 = vmatpush.bf16.msra.mxu0 %v182
    %192 = vmatmul.bf16.gmra.mxu0 %v178
    %v193 = vpop.f32.mrf.mxu0
    %v194 = vadd.f32 0.0, %v193
    %v195 = vpop.f32.mrf.mxu0
    %196 = vdwg.mxu0
    %v197 = vrcp.pop %v175
    %v198 = vmul.f32 %v194, %v197
    %200 = vrot.lane.b32.xlu0 %v146, 120
    %v201 = vpop.permute.xlu0 %200
    %v203 = vunpack.c.l.b16 %v107
    %v204 = vpack.c.b16 %v203, %v203
    %205 = vrot.lane.b32.xlu0 %v204, 120
    %v206 = vpop.permute.xlu0 %205
    %v208 = vsel %vm147, %v201, 0
    %v211 = vsel %vm147, %v206, 0
    %213 = vmatpush.bf16.xpose.msra.mxu0 0
    %214 = vmatpush.bf16.xpose.msra.mxu0 0
    %215 = vmatpush.bf16.xpose.msra.mxu0 0
    %216 = vmatpush.bf16.xpose.msra.mxu0 0
    %217 = vmatpush.bf16.xpose.msra.mxu0 0
    %218 = vmatpush.bf16.xpose.msra.mxu0 0
    %219 = vmatpush.bf16.xpose.msra.mxu0 0
    %220 = vmatpush.bf16.xpose.msra.mxu0 %v211
    %221 = vmatmul.bf16.gmra.mxu0 %v208
    %v222 = vpop.f32.mrf.mxu0
    %v223 = vadd.f32 0.0, %v222
    %v224 = vpop.f32.mrf.mxu0
    %225 = vdwg.mxu0
    %v226 = vsel %vm147, %v223, -inf
    %227 = vmax.xlane.f32.xlu0 %v226
    %v228 = vpop.xlane.xlu0 %227
    %v229 = vsub.f32 %v223, %v228
    %v230 = vmul.f32 %v229, 1.442695
    %v231 = vpow.pop %v230
    %v232 = vsel %vm147, %v231, 0.0
    %233 = vadd.xlane.f32.xlu0 %v232
    %v234 = vpop.xlane.xlu0 %233
    %v235 = vpack.c.bf16 %v231, %v231
    %v237 = vunpack.c.l.b16 %v108
    %v238 = vpack.c.b16 %v237, %v237
    %239 = vrot.lane.b32.xlu0 %v238, 120
    %v240 = vpop.permute.xlu0 %239
    %v242 = vsel %vm147, %v235, 0
    %v245 = vsel %vm180, %v240, 0
    %247 = vmatpush.bf16.msra.mxu0 0
    %248 = vmatpush.bf16.msra.mxu0 0
    %249 = vmatpush.bf16.msra.mxu0 0
    %250 = vmatpush.bf16.msra.mxu0 0
    %251 = vmatpush.bf16.msra.mxu0 0
    %252 = vmatpush.bf16.msra.mxu0 0
    %253 = vmatpush.bf16.msra.mxu0 0
    %254 = vmatpush.bf16.msra.mxu0 %v245
    %255 = vmatmul.bf16.gmra.mxu0 %v242
    %v256 = vpop.f32.mrf.mxu0
    %v257 = vadd.f32 0.0, %v256
    %v258 = vpop.f32.mrf.mxu0
    %259 = vdwg.mxu0
    %v260 = vrcp.pop %v234
    %v261 = vmul.f32 %v257, %v260
    %262 = vrot.lane.b32.xlu0 %v146, 112
    %v263 = vpop.permute.xlu0 %262
    %264 = vrot.lane.b32.xlu0 %v204, 112
    %v265 = vpop.permute.xlu0 %264
    %v267 = vsel %vm147, %v263, 0
    %v270 = vsel %vm147, %v265, 0
    %272 = vmatpush.bf16.xpose.msra.mxu0 0
    %273 = vmatpush.bf16.xpose.msra.mxu0 0
    %274 = vmatpush.bf16.xpose.msra.mxu0 0
    %275 = vmatpush.bf16.xpose.msra.mxu0 0
    %276 = vmatpush.bf16.xpose.msra.mxu0 0
    %277 = vmatpush.bf16.xpose.msra.mxu0 0
    %278 = vmatpush.bf16.xpose.msra.mxu0 0
    %279 = vmatpush.bf16.xpose.msra.mxu0 %v270
    %280 = vmatmul.bf16.gmra.mxu0 %v267
    %v281 = vpop.f32.mrf.mxu0
    %v282 = vadd.f32 0.0, %v281
    %v283 = vpop.f32.mrf.mxu0
    %284 = vdwg.mxu0
    %v285 = vsel %vm147, %v282, -inf
    %286 = vmax.xlane.f32.xlu0 %v285
    %v287 = vpop.xlane.xlu0 %286
    %v288 = vsub.f32 %v282, %v287
    %v289 = vmul.f32 %v288, 1.442695
    %v290 = vpow.pop %v289
    %v291 = vsel %vm147, %v290, 0.0
    %292 = vadd.xlane.f32.xlu0 %v291
    %v293 = vpop.xlane.xlu0 %292
    %v294 = vpack.c.bf16 %v290, %v290
    %295 = vrot.lane.b32.xlu0 %v238, 112
    %v296 = vpop.permute.xlu0 %295
    %v298 = vsel %vm147, %v294, 0
    %v301 = vsel %vm180, %v296, 0
    %303 = vmatpush.bf16.msra.mxu0 0
    %304 = vmatpush.bf16.msra.mxu0 0
    %305 = vmatpush.bf16.msra.mxu0 0
    %306 = vmatpush.bf16.msra.mxu0 0
    %307 = vmatpush.bf16.msra.mxu0 0
    %308 = vmatpush.bf16.msra.mxu0 0
    %309 = vmatpush.bf16.msra.mxu0 0
    %310 = vmatpush.bf16.msra.mxu0 %v301
    %311 = vmatmul.bf16.gmra.mxu0 %v298
    %v312 = vpop.f32.mrf.mxu0
    %v313 = vadd.f32 0.0, %v312
    %v314 = vpop.f32.mrf.mxu0
    %315 = vdwg.mxu0
    %v316 = vrcp.pop %v293
    %v317 = vmul.f32 %v313, %v316
    %318 = vrot.lane.b32.xlu0 %v146, 104
    %v319 = vpop.permute.xlu0 %318
    %320 = vrot.lane.b32.xlu0 %v204, 104
    %v321 = vpop.permute.xlu0 %320
    %v323 = vsel %vm147, %v319, 0
    %v326 = vsel %vm147, %v321, 0
    %328 = vmatpush.bf16.xpose.msra.mxu0 0
    %329 = vmatpush.bf16.xpose.msra.mxu0 0
    %330 = vmatpush.bf16.xpose.msra.mxu0 0
    %331 = vmatpush.bf16.xpose.msra.mxu0 0
    %332 = vmatpush.bf16.xpose.msra.mxu0 0
    %333 = vmatpush.bf16.xpose.msra.mxu0 0
    %334 = vmatpush.bf16.xpose.msra.mxu0 0
    %335 = vmatpush.bf16.xpose.msra.mxu0 %v326
    %336 = vmatmul.bf16.gmra.mxu0 %v323
    %v337 = vpop.f32.mrf.mxu0
    %v338 = vadd.f32 0.0, %v337
    %v339 = vpop.f32.mrf.mxu0
    %340 = vdwg.mxu0
    %v341 = vsel %vm147, %v338, -inf
    %342 = vmax.xlane.f32.xlu0 %v341
    %v343 = vpop.xlane.xlu0 %342
    %v344 = vsub.f32 %v338, %v343
    %v345 = vmul.f32 %v344, 1.442695
    %v346 = vpow.pop %v345
    %v347 = vsel %vm147, %v346, 0.0
    %348 = vadd.xlane.f32.xlu0 %v347
    %v349 = vpop.xlane.xlu0 %348
    %v350 = vpack.c.bf16 %v346, %v346
    %351 = vrot.lane.b32.xlu0 %v238, 104
    %v352 = vpop.permute.xlu0 %351
    %v354 = vsel %vm147, %v350, 0
    %v357 = vsel %vm180, %v352, 0
    %359 = vmatpush.bf16.msra.mxu0 0
    %360 = vmatpush.bf16.msra.mxu0 0
    %361 = vmatpush.bf16.msra.mxu0 0
    %362 = vmatpush.bf16.msra.mxu0 0
    %363 = vmatpush.bf16.msra.mxu0 0
    %364 = vmatpush.bf16.msra.mxu0 0
    %365 = vmatpush.bf16.msra.mxu0 0
    %366 = vmatpush.bf16.msra.mxu0 %v357
    %367 = vmatmul.bf16.gmra.mxu0 %v354
    %v368 = vpop.f32.mrf.mxu0
    %v369 = vadd.f32 0.0, %v368
    %v370 = vpop.f32.mrf.mxu0
    %371 = vdwg.mxu0
    %v372 = vrcp.pop %v349
    %v373 = vmul.f32 %v369, %v372
    %375 = vrot.lane.b32.xlu0 %v261, 8
    %v376 = vpop.permute.xlu0 %375
    %379 = vrot.lane.b32.xlu0 %v317, 16
    %v380 = vpop.permute.xlu0 %379
    %383 = vrot.lane.b32.xlu0 %v373, 24
    %v384 = vpop.permute.xlu0 %383
    %v386 = vsel %vm147, %v198, %v376
    %vm387 = vcmask 130048
    %v388 = vsel %vm387, %v386, %v380
    %vm389 = vcmask 195584
    %v390 = vsel %vm389, %v388, %v384
    %v391 = vpack.c.bf16 %v390, %v390
    %v392 = vld [vmem:[#allocation11] sm:$0xff]
    %v393 = vld [vmem:[#allocation10] sm:$0xf]
    %v394 = vld [vmem:[#allocation10 + $0x4] sm:$0xf]
    %v395 = vld [vmem:[#allocation10 + $0x8] sm:$0xf]
    %v396 = vld [vmem:[#allocation10 + $0xc] sm:$0xf]
    %v401 = vunpack.c.l.b16 %v393
    %v402 = vunpack.c.l.b16 %v394
    %v403 = vunpack.c.l.b16 %v395
    %v404 = vunpack.c.l.b16 %v396
    %v405 = vpack.c.b16 %v402, %v401
    %v406 = vpack.c.b16 %v404, %v403
    %v410 = vsel %vm129, %v391, 0
    %412 = vmatpush.bf16.msra.mxu0 0
    %413 = vmatpush.bf16.msra.mxu0 0
    %414 = vmatpush.bf16.msra.mxu0 0
    %415 = vmatpush.bf16.msra.mxu0 0
    %416 = vmatpush.bf16.msra.mxu0 0
    %417 = vmatpush.bf16.msra.mxu0 0
    %418 = vmatpush.bf16.msra.mxu0 %v406
    %419 = vmatpush.bf16.msra.mxu0 %v405
    %420 = vmatmul.bf16.gmra.mxu0 %v410
    %v421 = vpop.f32.mrf.mxu0
    %v422 = vadd.f32 0.0, %v421
    %v423 = vpop.f32.mrf.mxu0
    %424 = vdwg.mxu0
    %v425 = vadd.f32 %v392, %v422
    %426 = vst.msk [vmem:[#allocation11] sm:$0xff] %vm129, %v425
    // Predicated region
    $region54: #{tpu_custom_call.1} parent=1 // pred_check
      %p427 = pneg %p100
    $region55: #{tpu_custom_call.1} parent=1 // pred_check_branch
      %429 = sbr.rel (%p427) target = $region57
    $region56: #{tpu_custom_call.1} parent=1 // pred_region
      %v430 = vld [vmem:[#allocation11] sm:$0xff]
      %v431 = vld [vmem:[%s6] sm:$0x1]
      %v433 = vperm.slane %v431, 0
      %v435 = vadd.f32 %v430, %v433
      %436 = vst.msk [vmem:[#allocation11] sm:$0xff] %vm129, %v435
    $region57: #{tpu_custom_call.1} parent=1 // pred_fallthru
      _
    // Predicated region
    $region58: #{tpu_custom_call.1} parent=1 // pred_check
      _
    $region59: #{tpu_custom_call.1} parent=1 // pred_check_branch
      %438 = sbr.rel (0) target = $region61
    $region60: #{tpu_custom_call.1} parent=1 // pred_region
      %440 = vsyncadd [#allocation4], 0
      %s442 = sshll.u32 [#allocation11], 4
      %s443 = int_to_ptr.vmem [resolvable:$true] %s442
      %s444 = sshll.u32 %s7, 4
      %s445 = int_to_ptr.hbm [resolvable:$true] %s444
      %447 = dma.vmem_to_hbm [thread:$0]  %s443, 128, %s445, [#allocation4]
    $region61: #{tpu_custom_call.1} parent=1 // pred_fallthru
      _
    // Predicated region
    $region62: #{tpu_custom_call.1} parent=1 // pred_check
      _
    $region63: #{tpu_custom_call.1} parent=1 // pred_check_branch
      %449 = sbr.rel (0) target = $region65
    $region64: #{tpu_custom_call.1} parent=1 // pred_region
      %451 = dma.done [#allocation4], 128
    $region65: #{tpu_custom_call.1} parent=1 // pred_fallthru
      _
    %452 = vsyncpa [#allocation3], 1
    %453 = vsyncpa [#allocation6], 1
    %454 = vsyncpa [#allocation9], 1
    %455 = vsyncpa [#allocation4], 1

</llo_original>
